<compile_context>
chip_gen: v6e
topology: v6e:2x2x1
jax: 0.10.0
libtpu: 0.0.40
codegen_flags: <defaults>
</compile_context>

<pallas_src>
import jax
import jax.numpy as jnp
from jax.experimental import pallas as pl
from jax.experimental.pallas import tpu as pltpu


def _round_up(x: int, m: int) -> int:
    return ((x + m - 1) // m) * m


def residual_linear_kernel(x_ref, w_ref, b_ref, o_ref):
    """out = (x @ W  [f32 acc]) + b + x   -- fused fn(x) + residual."""
    # Matmul operands in the weight dtype (bf16 fast path / f32 exact path),
    # f32 accumulation on the MXU.
    y = jnp.dot(
        x_ref[...].astype(w_ref.dtype),
        w_ref[...],
        preferred_element_type=jnp.float32,
    )
    # Bias + residual in f32 (v5e VPU has no bf16 math); residual re-read from
    # the ref after the dot to keep the live range short.  Single final cast.
    res = x_ref[...].astype(jnp.float32)
    o_ref[...] = (y + b_ref[...].astype(jnp.float32) + res).astype(o_ref.dtype)


def _pick_tile_t(T: int, max_tile: int) -> int:
    """Token tile: multiple of 8 sublanes, <= T, and grid >= 2 when possible
    (v7x has 2 TensorCores; a 1-step 'parallel' axis idles one of them)."""
    if T <= 8:
        return T                      # single block equal to the full extent
    t = min(max_tile, T)
    t = min(t, -(-T // 2))            # keep at least 2 grid steps
    return max(8, (t // 8) * 8)


def _vmem_budget_bytes(tile_t: int, D: int, x_bytes: int, w_bytes: int) -> int:
    """Double-buffered streamed blocks + resident weight/bias, plus headroom.
    Floored at 32 MiB (safe on v5e/v6e/v7x), capped at 128 MiB."""
    lanes = _round_up(D, 128)
    need = (
        2 * tile_t * D * x_bytes      # activation blocks (in)
        + 2 * tile_t * D * x_bytes    # output blocks
        + 2 * D * lanes * w_bytes     # weight (constant index_map, 2 buffers)
        + 2 * 8 * lanes * 4           # bias, padded to an (8,128) tile
    )
    return int(min(128 << 20, max(32 << 20, int(need * 1.25) + (4 << 20))))


def _residual_add_linear(x2d, w, b, tile_t: int, vmem_limit_bytes: int):
    """x2d: (T, D); w: (D, D) bf16 or f32; b: (1, D) f32."""
    T, D = x2d.shape
    grid = (pl.cdiv(T, tile_t),)      # ragged last block handled by Pallas
    return pl.pallas_call(
        residual_linear_kernel,
        out_shape=jax.ShapeDtypeStruct((T, D), x2d.dtype),
        grid_spec=pl.GridSpec(
            grid=grid,
            in_specs=[
                # streamed activation tile (auto double-buffered pipeline)
                pl.BlockSpec((tile_t, D), lambda i: (i, 0)),
                # weight + bias: constant index_map -> DMA'd once, resident
                pl.BlockSpec((D, D), lambda i: (0, 0)),
                pl.BlockSpec((1, D), lambda i: (0, 0)),
            ],
            out_specs=pl.BlockSpec((tile_t, D), lambda i: (i, 0)),
        ),
        compiler_params=pltpu.CompilerParams(
            dimension_semantics=("parallel",),     # token axis is independent
            vmem_limit_bytes=vmem_limit_bytes,
        ),
    )(x2d, w, b)


def prepare_params(w, b, matmul_dtype=jnp.bfloat16):
    """One-time parameter prep (hoisted out of the per-step forward):
    cast the weight to the MXU operand dtype; keep the bias in f32."""
    return w.astype(matmul_dtype), b.astype(jnp.float32).reshape(1, -1)


def residual_add_forward(x, w, b, max_tile_t: int = 1024):
    """x: (B, N, D) ViT tokens (any float dtype); w: (D, D) already in the
    matmul dtype (see prepare_params); b: (1, D) f32.
    Returns fn(x) + x with fn = Linear(D, D), in x's dtype."""
    B, N, D = x.shape
    assert w.shape == (D, D) and b.shape == (1, D)
    T = B * N
    x2d = x.reshape(T, D)

    tile_t = _pick_tile_t(T, max_tile_t)
    vmem = _vmem_budget_bytes(tile_t, D, x.dtype.itemsize, w.dtype.itemsize)
    out2d = _residual_add_linear(x2d, w, b, tile_t, vmem)
    return out2d.reshape(B, N, D)


if __name__ == "__main__":
    key = jax.random.PRNGKey(0)
    kx, kw, kb = jax.random.split(key, 3)

    # Small ViT-ish shapes; D = 128 keeps output stores lane-dense.
    B, N, D = 2, 16, 128
    x_f32 = jax.random.normal(kx, (B, N, D), dtype=jnp.float32)
    w_f32 = jax.random.normal(kw, (D, D), dtype=jnp.float32) * (1.0 / jnp.sqrt(D))
    b_f32 = jax.random.normal(kb, (D,), dtype=jnp.float32) * 0.01

    # ---- fast path: bf16 activations + bf16 weight (f32 accumulate) --------
    w_bf16, b_prep = prepare_params(w_f32, b_f32, jnp.bfloat16)   # once, not per call
    x_bf16 = x_f32.astype(jnp.bfloat16)
    out_bf16 = jax.block_until_ready(residual_add_forward(x_bf16, w_bf16, b_prep))
    assert out_bf16.dtype == jnp.bfloat16

    x2d = x_bf16.reshape(B * N, D)
    ref_bf16 = (
        jnp.dot(x2d, w_bf16, preferred_element_type=jnp.float32)
        + b_prep[0]
        + x2d.astype(jnp.float32)
    ).astype(jnp.bfloat16).reshape(B, N, D)
    assert jnp.allclose(
        out_bf16.astype(jnp.float32), ref_bf16.astype(jnp.float32),
        atol=5e-2, rtol=5e-2,
    ), "bf16 path mismatch vs reference"

    # ---- exact path: f32 weight -> f32 matmul (PyTorch f32 nn.Linear) ------
    w_f32p, b_prep32 = prepare_params(w_f32, b_f32, jnp.float32)
    out_f32 = jax.block_until_ready(residual_add_forward(x_f32, w_f32p, b_prep32))
    ref_f32 = (
        jnp.dot(x_f32.reshape(-1, D), w_f32, preferred_element_type=jnp.float32)
        + b_f32
        + x_f32.reshape(-1, D)
    ).reshape(B, N, D)
    # Loose tolerance covers possible MXU f32-via-bf16 pass-count differences
    # between the Pallas dot and the XLA reference dot.
    assert jnp.allclose(out_f32, ref_f32, atol=3e-2, rtol=3e-2), \
        "f32 path mismatch vs reference"

    print("KERNEL_OK")
</pallas_src>

<mosaic_0001>
module attributes {stable_mosaic.version = 11 : i64} {
  func.func @residual_linear_kernel(%arg0: i32, %arg1: memref<16x128xbf16, #tpu.memory_space<vmem>>, %arg2: memref<128x128xbf16, #tpu.memory_space<vmem>>, %arg3: memref<1x128xf32, #tpu.memory_space<vmem>>, %arg4: memref<16x128xbf16, #tpu.memory_space<vmem>>) attributes {dimension_semantics = [#tpu.dimension_semantics<parallel>], iteration_bounds = array<i64: 2>, scalar_prefetch = 0 : i64, scratch_operands = 0 : i64, tpu.core_type = #tpu.core_type<tc>, window_params = [{transform_indices = @transform_0, window_bounds = array<i64: 16, 128>}, {pipeline_mode = #tpu.pipeline_mode<synchronous>, transform_indices = @transform_1, window_bounds = array<i64: 128, 128>}, {pipeline_mode = #tpu.pipeline_mode<synchronous>, transform_indices = @transform_2, window_bounds = array<i64: 1, 128>}, {transform_indices = @transform_3, window_bounds = array<i64: 16, 128>}]} {
    %c0 = arith.constant 0 : index
    %c0_0 = arith.constant 0 : index
    %0 = vector.load %arg1[%c0, %c0_0] : memref<16x128xbf16, #tpu.memory_space<vmem>>, vector<16x128xbf16>
    %c0_1 = arith.constant 0 : index
    %c0_2 = arith.constant 0 : index
    %1 = vector.load %arg2[%c0_1, %c0_2] : memref<128x128xbf16, #tpu.memory_space<vmem>>, vector<128x128xbf16>
    %cst = arith.constant dense<0.000000e+00> : vector<16x128xf32>
    %2 = tpu.matmul %0, %1, %cst {dimension_numbers = #tpu.dot_dimension_numbers<[1], [0], [0], [1], [0, 0, 1, 1], [], []>} : vector<16x128xbf16>, vector<128x128xbf16>, vector<16x128xf32> -> vector<16x128xf32>
    %c0_3 = arith.constant 0 : index
    %c0_4 = arith.constant 0 : index
    %3 = vector.load %arg1[%c0_3, %c0_4] : memref<16x128xbf16, #tpu.memory_space<vmem>>, vector<16x128xbf16>
    %4 = arith.extf %3 : vector<16x128xbf16> to vector<16x128xf32>
    %c0_5 = arith.constant 0 : index
    %c0_6 = arith.constant 0 : index
    %5 = vector.load %arg3[%c0_5, %c0_6] : memref<1x128xf32, #tpu.memory_space<vmem>>, vector<1x128xf32>
    %6 = vector.broadcast %5 : vector<1x128xf32> to vector<16x128xf32>
    %7 = arith.addf %2, %6 : vector<16x128xf32>
    %8 = arith.addf %7, %4 : vector<16x128xf32>
    %9 = arith.truncf %8 : vector<16x128xf32> to vector<16x128xbf16>
    %c0_7 = arith.constant 0 : index
    %c0_8 = arith.constant 0 : index
    %10 = vector.load %arg4[%c0_7, %c0_8] : memref<16x128xbf16, #tpu.memory_space<vmem>>, vector<16x128xbf16>
    tpu.vector_store %arg4[%c0_7, %c0_8], %9 {strides = array<i32>} : memref<16x128xbf16, #tpu.memory_space<vmem>>, vector<16x128xbf16>,
    return
  }
  func.func @transform_0(%arg0: i32) -> (i32, i32) {
    %c0_i32 = arith.constant 0 : i32
    %c0_i32_0 = arith.constant 0 : i32
    return %arg0, %c0_i32 : i32, i32
  }
  func.func @transform_1(%arg0: i32) -> (i32, i32) {
    %c0_i32 = arith.constant 0 : i32
    %c0_i32_0 = arith.constant 0 : i32
    %c0_i32_1 = arith.constant 0 : i32
    return %c0_i32, %c0_i32_0 : i32, i32
  }
  func.func @transform_2(%arg0: i32) -> (i32, i32) {
    %c0_i32 = arith.constant 0 : i32
    %c0_i32_0 = arith.constant 0 : i32
    %c0_i32_1 = arith.constant 0 : i32
    return %c0_i32, %c0_i32_0 : i32, i32
  }
  func.func @transform_3(%arg0: i32) -> (i32, i32) {
    %c0_i32 = arith.constant 0 : i32
    %c0_i32_0 = arith.constant 0 : i32
    return %arg0, %c0_i32 : i32, i32
  }
}

</mosaic_0001>

<llo_original>
// kernel: tpu_custom_call.1
$region0: #{tpu_custom_call.1}
  #allocation0 [shape = 'u32[]', space=smem, size = 0x4, offset = 0x4, fixed_abs, tag = 'smem constant byte address 0x4 - core index']
  #allocation1 [shape = 'u32[144,128]{1,0:T(1,128)}', space=vmem, size = 0x12000, scoped, tag = 'internal scratch']
  %s0 = inlined_call_operand.hbm [shape: bf16[32,128], index: 0, kind: input, shape index: {}]
  %s1 = inlined_call_operand.hbm [shape: bf16[128,128], index: 1, kind: input, shape index: {}]
  %s2 = inlined_call_operand.vmem [shape: f32[1,128], index: 2, kind: input, shape index: {}]
  %s3 = inlined_call_operand.hbm [shape: bf16[32,128], index: 3, kind: output, shape index: {}]
  %s4 = sld [smem:[#allocation0]]
  $region53: #{tpu_custom_call.1} parent=0
    _
  %s6 = ssub.s32 1, %s4
  %s7 = scalar_select 0, %s6, %s4
  $region1: #{tpu_custom_call.1} parent=0
    #allocation2 [shape = 'u8[8192]{0}', space=vmem, size = 0x2000, scoped, tag = 'input window, operand 0']
    #allocation3 [shape = 's32[2]{0}', space=sflag, size = 0x8, scoped, tag = 'scoped memory for tpu_custom_call.1']
    #allocation4 [shape = 's32[2]{0}', space=sflag, size = 0x8, scoped, tag = 'scoped memory for tpu_custom_call.1']
    #allocation5 [shape = 'u8[32768]{0}', space=vmem, size = 0x8000, scoped, tag = 'input window, operand 1, single buffered']
    #allocation6 [shape = 's32[1]{0}', space=sflag, size = 0x4, scoped, tag = 'scoped memory for tpu_custom_call.1']
    #allocation7 [shape = 'u8[8192]{0}', space=vmem, size = 0x2000, scoped, tag = 'output window, operand 0']
    %8 = vsyncpa [#allocation3], 0
    %s9 = scalar_lea.sflag [#allocation3], 1
    %10 = vsyncpa %s9, 0
    %11 = vsyncpa [#allocation6], 0
    %12 = vsyncpa [#allocation4], 0
    %s13 = scalar_lea.sflag [#allocation4], 1
    %14 = vsyncpa %s13, 0
    loop: start=0, step=1, limit=4
    $region2: #{tpu_custom_call.1} parent=1 // loop_pre_header
      _
    $region3: #{tpu_custom_call.1} parent=1 // loop_header
      %s16 = sphi 0, %s20
      %p17 = scmp.ge.s32.totalorder %s16, 4
      %s26 = sphi 0, %s28
      %s29 = sphi 0, %s26
      %s30 = sphi 0, %s29
      %s46 = sphi 0, %s30
      %s50 = sphi 0, %s50
      %s52 = sphi 0, %s50
      %s53 = sphi 0, %s52
      %s67 = sphi 0, %s53
      %s71 = sphi 0, %s71
      %s73 = sphi 0, %s71
      %s74 = sphi 0, %s73
      %s88 = sphi 0, %s74
      %s94 = sphi 0, %s96
      %s97 = sphi 0, %s94
      %s98 = sphi 0, %s97
      %s114 = sphi 0, %s98
    $region4: #{tpu_custom_call.1} parent=1 // loop_header_branch
      %19 = sbr.rel (%p17) target = $region8
    $region5: #{tpu_custom_call.1} parent=1 // loop_body
      %s21 = ssub.s32 %s16, 1
      %s22 = ssub.s32 %s16, 2
      %s23 = sadd.s32 %s16, 1
      %s24 = ssub.s32 %s16, %s23
      %p25 = scmp.eq.s32.totalorder %s24, 0
      %s27 = sadd.s32 %s26, 1
      %s28 = scalar_select %p25, %s26, %s27
      %p31 = pneg %p25
      %p32 = scmp.eq.s32.totalorder %s16, 1
      %p33 = por %p31, %p32
      %p34 = scmp.ne.s32.totalorder %s26, %s29
      %p35 = scmp.eq.s32.totalorder %s16, 0
      %p36 = por %p34, %p35
      %p37 = scmp.ne.s32.totalorder %s26, %s29
      %p38 = scmp.eq.s32.totalorder %s21, 1
      %p39 = por %p37, %p38
      %p40 = scmp.ne.s32.totalorder %s29, %s30
      %p41 = scmp.eq.s32.totalorder %s21, 0
      %p42 = por %p40, %p41
      %p43 = scmp.ne.s32.totalorder %s29, %s30
      %p44 = scmp.eq.s32.totalorder %s22, 1
      %p45 = por %p43, %p44
      %p47 = scmp.ne.s32.totalorder %s30, %s46
      %p48 = scmp.eq.s32.totalorder %s22, 0
      %p49 = por %p47, %p48
      %s51 = sadd.s32 %s50, 1
      %p54 = scmp.eq.s32.totalorder %s16, 1
      %p55 = scmp.ne.s32.totalorder %s50, %s52
      %p56 = scmp.eq.s32.totalorder %s16, 0
      %p57 = por %p55, %p56
      %p58 = scmp.ne.s32.totalorder %s50, %s52
      %p59 = scmp.eq.s32.totalorder %s21, 1
      %p60 = por %p58, %p59
      %p61 = scmp.ne.s32.totalorder %s52, %s53
      %p62 = scmp.eq.s32.totalorder %s21, 0
      %p63 = por %p61, %p62
      %p64 = scmp.ne.s32.totalorder %s52, %s53
      %p65 = scmp.eq.s32.totalorder %s22, 1
      %p66 = por %p64, %p65
      %p68 = scmp.ne.s32.totalorder %s53, %s67
      %p69 = scmp.eq.s32.totalorder %s22, 0
      %p70 = por %p68, %p69
      %s72 = sadd.s32 %s71, 1
      %p75 = scmp.eq.s32.totalorder %s16, 1
      %p76 = scmp.ne.s32.totalorder %s71, %s73
      %p77 = scmp.eq.s32.totalorder %s16, 0
      %p78 = por %p76, %p77
      %p79 = scmp.ne.s32.totalorder %s71, %s73
      %p80 = scmp.eq.s32.totalorder %s21, 1
      %p81 = por %p79, %p80
      %p82 = scmp.ne.s32.totalorder %s73, %s74
      %p83 = scmp.eq.s32.totalorder %s21, 0
      %p84 = por %p82, %p83
      %p85 = scmp.ne.s32.totalorder %s73, %s74
      %p86 = scmp.eq.s32.totalorder %s22, 1
      %p87 = por %p85, %p86
      %p89 = scmp.ne.s32.totalorder %s74, %s88
      %p90 = scmp.eq.s32.totalorder %s22, 0
      %p91 = por %p89, %p90
      %s92 = ssub.s32 %s16, %s23
      %p93 = scmp.eq.s32.totalorder %s92, 0
      %s95 = sadd.s32 %s94, 1
      %s96 = scalar_select %p93, %s94, %s95
      %p99 = pneg %p93
      %p100 = scmp.eq.s32.totalorder %s16, 1
      %p101 = por %p99, %p100
      %p102 = scmp.ne.s32.totalorder %s94, %s97
      %p103 = scmp.eq.s32.totalorder %s16, 0
      %p104 = por %p102, %p103
      %p105 = scmp.ne.s32.totalorder %s94, %s97
      %p106 = scmp.eq.s32.totalorder %s21, 1
      %p107 = por %p105, %p106
      %p108 = scmp.ne.s32.totalorder %s97, %s98
      %p109 = scmp.eq.s32.totalorder %s21, 0
      %p110 = por %p108, %p109
      %p111 = scmp.ne.s32.totalorder %s97, %s98
      %p112 = scmp.eq.s32.totalorder %s22, 1
      %p113 = por %p111, %p112
      %p115 = scmp.ne.s32.totalorder %s98, %s114
      %p116 = scmp.eq.s32.totalorder %s22, 0
      %p117 = por %p115, %p116
      %p118 = scmp.le.s32.totalorder 1, %s16
      %p119 = scmp.lt.s32.totalorder %s16, 3
      %p120 = pnand %p118, %p119
      %p121 = pneg %p120
      // Predicated region
      $region9: #{tpu_custom_call.1} parent=5 // pred_check
        _
      $region10: #{tpu_custom_call.1} parent=5 // pred_check_branch
        %123 = sbr.rel (%p120) target = $region12
      $region11: #{tpu_custom_call.1} parent=5 // pred_region
        %s124 = ssub.s32 %s16, 1
        // Predicated region
        $region13: #{tpu_custom_call.1} parent=11 // pred_check
          %p125 = pneg %p63
        $region14: #{tpu_custom_call.1} parent=11 // pred_check_branch
          %127 = sbr.rel (%p125) target = $region16
        $region15: #{tpu_custom_call.1} parent=11 // pred_region
          %s129 = ssub.s32 1024, 1024
          %130 = vsyncadd [#allocation6], %s129
          %s131 = sshll.u32 [#allocation5], 4
          %s132 = int_to_ptr.vmem [resolvable:$true] %s131
          %137 = dma.hbm_to_vmem [thread:$0]  %s1, 1024, %s132, [#allocation6], 64, 64, 4
        $region16: #{tpu_custom_call.1} parent=11 // pred_fallthru
          _
        // Predicated region
        $region17: #{tpu_custom_call.1} parent=11 // pred_check
          %p138 = pneg %p84
        $region18: #{tpu_custom_call.1} parent=11 // pred_check_branch
          %140 = sbr.rel (%p138) target = $region20
        $region19: #{tpu_custom_call.1} parent=11 // pred_region
          _
        $region20: #{tpu_custom_call.1} parent=11 // pred_fallthru
          _
      $region12: #{tpu_custom_call.1} parent=5 // pred_fallthru
        _
      %p141 = scmp.lt.s32.totalorder %s16, 2
      // Predicated region
      $region21: #{tpu_custom_call.1} parent=5 // pred_check
        %p142 = pneg %p141
      $region22: #{tpu_custom_call.1} parent=5 // pred_check_branch
        %144 = sbr.rel (%p142) target = $region24
      $region23: #{tpu_custom_call.1} parent=5 // pred_region
        // Predicated region
        $region25: #{tpu_custom_call.1} parent=23 // pred_check
          %p145 = pneg %p36
        $region26: #{tpu_custom_call.1} parent=23 // pred_check_branch
          %147 = sbr.rel (%p145) target = $region28
        $region27: #{tpu_custom_call.1} parent=23 // pred_region
          %s148 = sand.u32 %s26, 1
          %s149 = scalar_lea.sflag [#allocation3], %s148
          %s150 = sand.u32 %s26, 1
          %s151 = smul.addr %s150, 8
          %s152 = scalar_lea.vmem [#allocation2], %s151
          %s153 = smul.u32 2, %s16
          %s155 = ssub.s32 128, 128
          %156 = vsyncadd %s149, %s155
          %s157 = smul.addr %s153, 64
          %s158 = scalar_lea.hbm %s0, %s157
          %s159 = sshll.u32 %s152, 4
          %s160 = int_to_ptr.vmem [resolvable:$true] %s159
          %165 = dma.hbm_to_vmem [thread:$0]  %s158, 128, %s160, %s149, 64, 64, 4
        $region28: #{tpu_custom_call.1} parent=23 // pred_fallthru
          _
      $region24: #{tpu_custom_call.1} parent=5 // pred_fallthru
        _
      %p166 = scmp.le.s32.totalorder 1, %s16
      %p167 = scmp.lt.s32.totalorder %s16, 3
      %p168 = pnand %p166, %p167
      %p169 = pneg %p168
      // Predicated region
      $region29: #{tpu_custom_call.1} parent=5 // pred_check
        _
      $region30: #{tpu_custom_call.1} parent=5 // pred_check_branch
        %171 = sbr.rel (%p168) target = $region32
      $region31: #{tpu_custom_call.1} parent=5 // pred_region
        %s172 = ssub.s32 %s16, 1
        %s173 = sand.u32 %s29, 1
        %s174 = scalar_lea.sflag [#allocation3], %s173
        %s175 = sand.u32 %s29, 1
        %s176 = smul.addr %s175, 8
        %s177 = scalar_lea.vmem [#allocation2], %s176
        // Predicated region
        $region33: #{tpu_custom_call.1} parent=31 // pred_check
          %p178 = pneg %p42
        $region34: #{tpu_custom_call.1} parent=31 // pred_check_branch
          %180 = sbr.rel (%p178) target = $region36
        $region35: #{tpu_custom_call.1} parent=31 // pred_region
          %181 = dma.done %s174, 128
        $region36: #{tpu_custom_call.1} parent=31 // pred_fallthru
          _
        // Predicated region
        $region37: #{tpu_custom_call.1} parent=31 // pred_check
          %p182 = pneg %p63
        $region38: #{tpu_custom_call.1} parent=31 // pred_check_branch
          %184 = sbr.rel (%p182) target = $region40
        $region39: #{tpu_custom_call.1} parent=31 // pred_region
          %185 = dma.done [#allocation6], 1024
        $region40: #{tpu_custom_call.1} parent=31 // pred_fallthru
          _
        %s186 = sand.u32 %s29, 1
        %s187 = scalar_lea.sflag [#allocation3], %s186
        %s188 = sand.u32 %s29, 1
        %s189 = smul.addr %s188, 8
        %s190 = scalar_lea.vmem [#allocation2], %s189
        %p191 = pneg %p42
        %p192 = pneg %p39
        %p193 = pneg %p63
        %p194 = pneg %p60
        %p195 = pneg %p84
        %p196 = pneg %p81
        %p197 = pneg %p110
        %p198 = pneg %p107
        %s199 = sand.u32 %s97, 1
        %s200 = scalar_lea.sflag [#allocation4], %s199
        %s201 = sand.u32 %s97, 1
        %s202 = smul.addr %s201, 8
        %s203 = scalar_lea.vmem [#allocation7], %s202
        %s204 = smul.u32 2, %s21
        %s205 = smul.u32 2, %s21
        %v207 = vld [vmem:[%s177] sm:$0xf]
        %v208 = vld [vmem:[%s177 + $0x4] sm:$0xf]
        %v209 = vld [vmem:[#allocation5] sm:$0xf]
        %v210 = vld [vmem:[#allocation5 + $0x4] sm:$0xf]
        %v211 = vld [vmem:[#allocation5 + $0x8] sm:$0xf]
        %v212 = vld [vmem:[#allocation5 + $0xc] sm:$0xf]
        %v213 = vld [vmem:[#allocation5 + $0x10] sm:$0xf]
        %v214 = vld [vmem:[#allocation5 + $0x14] sm:$0xf]
        %v215 = vld [vmem:[#allocation5 + $0x18] sm:$0xf]
        %v216 = vld [vmem:[#allocation5 + $0x1c] sm:$0xf]
        %v217 = vld [vmem:[#allocation5 + $0x20] sm:$0xf]
        %v218 = vld [vmem:[#allocation5 + $0x24] sm:$0xf]
        %v219 = vld [vmem:[#allocation5 + $0x28] sm:$0xf]
        %v220 = vld [vmem:[#allocation5 + $0x2c] sm:$0xf]
        %v221 = vld [vmem:[#allocation5 + $0x30] sm:$0xf]
        %v222 = vld [vmem:[#allocation5 + $0x34] sm:$0xf]
        %v223 = vld [vmem:[#allocation5 + $0x38] sm:$0xf]
        %v224 = vld [vmem:[#allocation5 + $0x3c] sm:$0xf]
        %v225 = vunpack.c.l.bf16 %v207
        %v226 = vunpack.c.l.bf16 %v208
        %v227 = vld [vmem:[%s2] sm:$0x1]
        %v229 = vlaneseq
        %v230 = vshrl.u32 %v229, 7
        %v231 = vsub.s32 0, %v230
        %v232 = vrot.slane %v227, %v231
        %v236 = vunpack.c.l.b16 %v207
        %v237 = vunpack.c.l.b16 %v208
        %v238 = vpack.c.b16 %v237, %v236
        %v256 = vunpack.c.l.b16 %v209
        %v257 = vunpack.c.l.b16 %v210
        %v258 = vunpack.c.l.b16 %v211
        %v259 = vunpack.c.l.b16 %v212
        %v260 = vunpack.c.l.b16 %v213
        %v261 = vunpack.c.l.b16 %v214
        %v262 = vunpack.c.l.b16 %v215
        %v263 = vunpack.c.l.b16 %v216
        %v264 = vunpack.c.l.b16 %v217
        %v265 = vunpack.c.l.b16 %v218
        %v266 = vunpack.c.l.b16 %v219
        %v267 = vunpack.c.l.b16 %v220
        %v268 = vunpack.c.l.b16 %v221
        %v269 = vunpack.c.l.b16 %v222
        %v270 = vunpack.c.l.b16 %v223
        %v271 = vunpack.c.l.b16 %v224
        %v272 = vpack.c.b16 %v257, %v256
        %v273 = vpack.c.b16 %v259, %v258
        %v274 = vpack.c.b16 %v261, %v260
        %v275 = vpack.c.b16 %v263, %v262
        %v276 = vpack.c.b16 %v265, %v264
        %v277 = vpack.c.b16 %v267, %v266
        %v278 = vpack.c.b16 %v269, %v268
        %v279 = vpack.c.b16 %v271, %v270
        %288 = vmatprep.subr.bf16.mxu0 0
        %289 = vmatpush1.bf16.msra.mxu0 %v279
        %290 = vmatprep.subr.bf16.mxu0 0
        %291 = vmatpush1.bf16.msra.mxu0 %v278
        %292 = vmatprep.subr.bf16.mxu0 0
        %293 = vmatpush1.bf16.msra.mxu0 %v277
        %294 = vmatprep.subr.bf16.mxu0 0
        %295 = vmatpush1.bf16.msra.mxu0 %v276
        %296 = vmatprep.subr.bf16.mxu0 0
        %297 = vmatpush1.bf16.msra.mxu0 %v275
        %298 = vmatprep.subr.bf16.mxu0 0
        %299 = vmatpush1.bf16.msra.mxu0 %v274
        %300 = vmatprep.subr.bf16.mxu0 0
        %301 = vmatpush1.bf16.msra.mxu0 %v273
        %302 = vmatprep.subr.bf16.mxu0 0
        %303 = vmatpush1.bf16.msra.mxu0 %v272
        %304 = vmatprep.subr.bf16.mxu0 0
        %305 = vmatpush2.bf16.msra.mxu0 0
        %306 = vmatprep.subr.bf16.mxu0 0
        %307 = vmatpush2.bf16.msra.mxu0 0
        %308 = vmatprep.subr.bf16.mxu0 0
        %309 = vmatpush2.bf16.msra.mxu0 0
        %310 = vmatprep.subr.bf16.mxu0 0
        %311 = vmatpush2.bf16.msra.mxu0 0
        %312 = vmatprep.subr.bf16.mxu0 0
        %313 = vmatpush2.bf16.msra.mxu0 0
        %314 = vmatprep.subr.bf16.mxu0 0
        %315 = vmatpush2.bf16.msra.mxu0 0
        %316 = vmatprep.subr.bf16.mxu0 0
        %317 = vmatpush2.bf16.msra.mxu0 0
        %318 = vmatprep.subr.bf16.mxu0 0
        %319 = vmatpush2.bf16.msra.mxu0 0
        %320 = vmatprep.mubr.bf16.mxu0 0
        %321 = vmatmul.mubr.bf16.gmra.mxu0 %v238
        %v322 = vpop.f32.mrf.mxu0
        %v323 = vadd.f32 %v232, %v322
        %v324 = vpop.f32.mrf.mxu0
        %v325 = vpop.f32.mrf.mxu0
        %v326 = vadd.f32 %v232, %v325
        %v327 = vpop.f32.mrf.mxu0
        %328 = vdwg.mxu0
        %v329 = vadd.f32 %v323, %v225
        %v330 = vadd.f32 %v326, %v226
        %v331 = vpack.c.bf16 %v330, %v329
        %v333 = vunpack.c.l.b16 %v331
        %v334 = vunpack.c.h.b16 %v331
        %v335 = vpack.c.b16 %v333, %v333
        %v336 = vpack.c.b16 %v334, %v334
        %339 = vst [vmem:[%s203] sm:$0xf] %v335
        %340 = vst [vmem:[%s203 + $0x4] sm:$0xf] %v336
        %s341 = sand.u32 %s97, 1
        %s342 = scalar_lea.sflag [#allocation4], %s341
        %s343 = sand.u32 %s97, 1
        %s344 = smul.addr %s343, 8
        %s345 = scalar_lea.vmem [#allocation7], %s344
        // Predicated region
        $region41: #{tpu_custom_call.1} parent=31 // pred_check
          %p346 = pneg %p107
        $region42: #{tpu_custom_call.1} parent=31 // pred_check_branch
          %348 = sbr.rel (%p346) target = $region44
        $region43: #{tpu_custom_call.1} parent=31 // pred_region
          %s349 = smul.u32 2, %s21
          %s351 = ssub.s32 128, 128
          %352 = vsyncadd %s342, %s351
          %s353 = smul.addr %s349, 64
          %s354 = scalar_lea.hbm %s3, %s353
          %s355 = sshll.u32 %s345, 4
          %s356 = int_to_ptr.vmem [resolvable:$true] %s355
          %361 = dma.vmem_to_hbm [thread:$0]  %s356, 128, %s354, %s342, 64, 64, 4
        $region44: #{tpu_custom_call.1} parent=31 // pred_fallthru
          _
      $region32: #{tpu_custom_call.1} parent=5 // pred_fallthru
        _
      %p362 = scmp.le.s32.totalorder 2, %s16
      // Predicated region
      $region45: #{tpu_custom_call.1} parent=5 // pred_check
        %p363 = pneg %p362
      $region46: #{tpu_custom_call.1} parent=5 // pred_check_branch
        %365 = sbr.rel (%p363) target = $region48
      $region47: #{tpu_custom_call.1} parent=5 // pred_region
        %s366 = ssub.s32 %s16, 2
        // Predicated region
        $region49: #{tpu_custom_call.1} parent=47 // pred_check
          %p367 = pneg %p113
        $region50: #{tpu_custom_call.1} parent=47 // pred_check_branch
          %369 = sbr.rel (%p367) target = $region52
        $region51: #{tpu_custom_call.1} parent=47 // pred_region
          %s370 = sand.u32 %s98, 1
          %s371 = scalar_lea.sflag [#allocation4], %s370
          %s372 = sand.u32 %s98, 1
          %s373 = smul.addr %s372, 8
          %s374 = scalar_lea.vmem [#allocation7], %s373
          %375 = dma.done %s371, 128
        $region52: #{tpu_custom_call.1} parent=47 // pred_fallthru
          _
      $region48: #{tpu_custom_call.1} parent=5 // pred_fallthru
        _
    $region6: #{tpu_custom_call.1} parent=1 // loop_footer
      %s20 = sadd.s32 1, %s16
    $region7: #{tpu_custom_call.1} parent=1 // loop_footer_branch
      %15 = sbr.rel target = $region3
    $region8: #{tpu_custom_call.1} parent=1 // loop_exit
      _
    %376 = vsyncpa [#allocation3], 1
    %s377 = scalar_lea.sflag [#allocation3], 1
    %378 = vsyncpa %s377, 1
    %379 = vsyncpa [#allocation6], 1
    %380 = vsyncpa [#allocation4], 1
    %s381 = scalar_lea.sflag [#allocation4], 1
    %382 = vsyncpa %s381, 1

</llo_original>
